<compile_context>
chip_gen: v5e
topology: v5e:2x2
jax: 0.10.0
libtpu: 0.0.40
codegen_flags: <defaults>
</compile_context>

<pallas_src>
import functools

import jax
import jax.numpy as jnp
from jax.experimental import pallas as pl
from jax.experimental.pallas import tpu as pltpu


def _cdiv(a: int, b: int) -> int:
    return -(-a // b)


def _round_up(a: int, b: int) -> int:
    return _cdiv(a, b) * b


def _make_single_pass_kernel(t_real: int):
    """Whole time axis in one block: compute per-sample loss in one shot."""
    t_f = float(t_real)

    def kernel(x_ref, y_ref, loss_ref):
        x = x_ref[...].astype(jnp.float32)
        y = y_ref[...].astype(jnp.float32)
        sum_x = jnp.sum(x, axis=1, keepdims=True)
        sum_y = jnp.sum(y, axis=1, keepdims=True)
        sum_xy = jnp.sum(x * y, axis=1, keepdims=True)
        sum_x2 = jnp.sum(x * x, axis=1, keepdims=True)
        sum_y2 = jnp.sum(y * y, axis=1, keepdims=True)
        denom = (t_f * sum_x2 - sum_x * sum_x) * (t_f * sum_y2 - sum_y * sum_y)
        denom = jnp.maximum(denom, jnp.float32(1e-6))
        # sqrt(denom) + 1e-6 kept exactly as in the reference (epsilon parity).
        loss_ref[...] = 1.0 - (t_f * sum_xy - sum_x * sum_y) / (jnp.sqrt(denom) + 1e-6)

    return kernel


def _make_accum_kernel(t_real: int):
    """Time-tiled variant: running sums in VMEM scratch, finalize at last k."""
    t_f = float(t_real)

    def kernel(x_ref, y_ref, loss_ref,
               sx_ref, sy_ref, sxy_ref, sx2_ref, sy2_ref):
        k = pl.program_id(1)

        @pl.when(k == 0)
        def _init():
            sx_ref[...] = jnp.zeros_like(sx_ref)
            sy_ref[...] = jnp.zeros_like(sy_ref)
            sxy_ref[...] = jnp.zeros_like(sxy_ref)
            sx2_ref[...] = jnp.zeros_like(sx2_ref)
            sy2_ref[...] = jnp.zeros_like(sy2_ref)

        # In-kernel f32 upcast (inputs stream in native dtype from HBM).
        x = x_ref[...].astype(jnp.float32)
        y = y_ref[...].astype(jnp.float32)

        # Lane-axis reductions (XLU). Zero-padded time columns add nothing.
        sx_ref[...] += jnp.sum(x, axis=1, keepdims=True)
        sy_ref[...] += jnp.sum(y, axis=1, keepdims=True)
        sxy_ref[...] += jnp.sum(x * y, axis=1, keepdims=True)
        sx2_ref[...] += jnp.sum(x * x, axis=1, keepdims=True)
        sy2_ref[...] += jnp.sum(y * y, axis=1, keepdims=True)

        @pl.when(k == pl.num_programs(1) - 1)
        def _finalize():
            sum_x = sx_ref[...]
            sum_y = sy_ref[...]
            sum_xy = sxy_ref[...]
            sum_x2 = sx2_ref[...]
            sum_y2 = sy2_ref[...]
            denom = (t_f * sum_x2 - sum_x * sum_x) * (t_f * sum_y2 - sum_y * sum_y)
            denom = jnp.maximum(denom, jnp.float32(1e-6))
            loss = 1.0 - (t_f * sum_xy - sum_x * sum_y) / (jnp.sqrt(denom) + 1e-6)
            loss_ref[...] = loss

    return kernel


def _choose_tiles(n: int, t: int, itemsize: int):
    """Pick (n_pad, tile_n, t_pad, tile_t) respecting (8,128) layout rules.

    Targets ~6 MiB per input block => 2 inputs x 2 pipeline buffers ~ 24 MiB.
    Tile sizes are balanced across blocks so padding waste stays bounded by
    one sublane/lane multiple rather than a whole tile.
    """
    SUB, LANE = 32, 128               # safe sublane/lane multiples (f32/bf16/i8)
    TARGET = 6 * 1024 * 1024          # bytes per input block
    n_r = _round_up(n, SUB)

    if SUB * t * itemsize <= TARGET:
        # Full time axis per block; tile (and balance) the batch axis only.
        target_tn = max(SUB, (TARGET // (t * itemsize)) // SUB * SUB)
        n_blocks = _cdiv(n_r, target_tn)
        tile_n = _round_up(_cdiv(n, n_blocks), SUB)
        tile_t = t
    else:
        # Very long sequences: tile time too (accumulator pattern).
        tile_n = min(256, n_r)
        target_tt = max(LANE, (TARGET // (tile_n * itemsize)) // LANE * LANE)
        t_blocks = _cdiv(t, target_tt)
        tile_t = _round_up(_cdiv(t, t_blocks), LANE)

    n_pad = _round_up(n, tile_n)
    t_pad = _round_up(t, tile_t)
    return n_pad, tile_n, t_pad, tile_t


@functools.partial(jax.jit, static_argnames=("reduction", "tile_override"))
def neg_pearson(preds, labels, reduction: str = "mean", tile_override=None):
    assert reduction in ["mean", "sum", "none"], "Unsupported reduction type!"
    assert preds.shape == labels.shape and preds.ndim == 2
    n, t = preds.shape
    itemsize = jnp.dtype(preds.dtype).itemsize

    if tile_override is not None:          # test hook: force a tiling
        tile_n, tile_t = tile_override
        n_pad, t_pad = _round_up(n, tile_n), _round_up(t, tile_t)
    else:
        n_pad, tile_n, t_pad, tile_t = _choose_tiles(n, t, itemsize)

    if (n_pad, t_pad) != (n, t):
        pad_cfg = ((0, n_pad - n), (0, t_pad - t))
        preds = jnp.pad(preds, pad_cfg)
        labels = jnp.pad(labels, pad_cfg)

    grid_n = n_pad // tile_n
    grid_t = t_pad // tile_t

    if grid_t == 1:
        # Common case: single pass over time, no scratch / no conditionals.
        per_sample = pl.pallas_call(
            _make_single_pass_kernel(t),
            out_shape=jax.ShapeDtypeStruct((n_pad, 1), jnp.float32),
            grid_spec=pltpu.PrefetchScalarGridSpec(
                num_scalar_prefetch=0,
                grid=(grid_n,),
                in_specs=[
                    pl.BlockSpec((tile_n, tile_t), lambda i: (i, 0)),
                    pl.BlockSpec((tile_n, tile_t), lambda i: (i, 0)),
                ],
                out_specs=pl.BlockSpec((tile_n, 1), lambda i: (i, 0)),
            ),
            compiler_params=pltpu.CompilerParams(
                dimension_semantics=("parallel",),
                vmem_limit_bytes=48 * 1024 * 1024,
            ),
        )(preds, labels)
    else:
        # Very long T: accumulate partial sums across time tiles.
        per_sample = pl.pallas_call(
            _make_accum_kernel(t),
            out_shape=jax.ShapeDtypeStruct((n_pad, 1), jnp.float32),
            grid_spec=pltpu.PrefetchScalarGridSpec(
                num_scalar_prefetch=0,
                grid=(grid_n, grid_t),
                in_specs=[
                    pl.BlockSpec((tile_n, tile_t), lambda i, k: (i, k)),
                    pl.BlockSpec((tile_n, tile_t), lambda i, k: (i, k)),
                ],
                out_specs=pl.BlockSpec((tile_n, 1), lambda i, k: (i, 0)),
                scratch_shapes=[pltpu.VMEM((tile_n, 1), jnp.float32)] * 5,
            ),
            compiler_params=pltpu.CompilerParams(
                dimension_semantics=("parallel", "arbitrary"),
                vmem_limit_bytes=48 * 1024 * 1024,
            ),
        )(preds, labels)

    per_sample = per_sample[:n, 0]  # drop batch padding
    if reduction == "mean":
        return jnp.mean(per_sample)
    elif reduction == "sum":
        return jnp.sum(per_sample)
    return per_sample


def _neg_pearson_ref(preds, labels, reduction="mean"):
    x = preds.astype(jnp.float32)
    y = labels.astype(jnp.float32)
    t = jnp.float32(x.shape[1])
    sx, sy = x.sum(1), y.sum(1)
    sxy, sx2, sy2 = (x * y).sum(1), (x * x).sum(1), (y * y).sum(1)
    den = jnp.maximum((t * sx2 - sx ** 2) * (t * sy2 - sy ** 2), 1e-6)
    loss = 1.0 - (t * sxy - sx * sy) / (jnp.sqrt(den) + 1e-6)
    if reduction == "mean":
        return loss.mean()
    if reduction == "sum":
        return loss.sum()
    return loss


if __name__ == "__main__":
    key = jax.random.PRNGKey(0)

    # Test 1: original small shape, mean reduction, f32 (single-pass path).
    k1, k2 = jax.random.split(key)
    preds = jax.random.normal(k1, (2, 8), dtype=jnp.float32)
    labels = jax.random.normal(k2, (2, 8), dtype=jnp.float32)
    loss = neg_pearson(preds, labels, reduction="mean")
    jax.block_until_ready(loss)
    ref = _neg_pearson_ref(preds, labels, "mean")
    assert jnp.allclose(loss, ref, atol=1e-5), (loss, ref)

    # Test 2: non-aligned batch / 'none' reduction / bf16 inputs (padding path,
    # native-dtype streaming with in-kernel f32 accumulation).
    k3, k4 = jax.random.split(k1)
    preds2 = jax.random.normal(k3, (5, 200), dtype=jnp.float32).astype(jnp.bfloat16)
    labels2 = jax.random.normal(k4, (5, 200), dtype=jnp.float32).astype(jnp.bfloat16)
    loss2 = neg_pearson(preds2, labels2, reduction="none")
    jax.block_until_ready(loss2)
    ref2 = _neg_pearson_ref(preds2, labels2, "none")
    assert loss2.shape == (5,)
    assert jnp.allclose(loss2, ref2, atol=2e-2), (loss2, ref2)

    # Test 3: force the time-tiled accumulator path on a small shape
    # (tile_override => grid axis 1 of size 3), sum reduction.
    k5, k6 = jax.random.split(k2)
    preds3 = jax.random.normal(k5, (4, 384), dtype=jnp.float32)
    labels3 = jax.random.normal(k6, (4, 384), dtype=jnp.float32)
    loss3 = neg_pearson(preds3, labels3, reduction="sum", tile_override=(32, 128))
    jax.block_until_ready(loss3)
    ref3 = _neg_pearson_ref(preds3, labels3, "sum")
    assert jnp.allclose(loss3, ref3, atol=1e-4), (loss3, ref3)

    print("KERNEL_OK")
</pallas_src>

<mosaic_0001>
module attributes {stable_mosaic.version = 11 : i64} {
  func.func @kernel(%arg0: i32, %arg1: memref<32x8xf32, #tpu.memory_space<vmem>>, %arg2: memref<32x8xf32, #tpu.memory_space<vmem>>, %arg3: memref<32x1xf32, #tpu.memory_space<vmem>>) attributes {dimension_semantics = [#tpu.dimension_semantics<parallel>], iteration_bounds = array<i64: 1>, scalar_prefetch = 0 : i64, scratch_operands = 0 : i64, tpu.core_type = #tpu.core_type<tc>, window_params = [{transform_indices = @transform_0, window_bounds = array<i64: 32, 8>}, {transform_indices = @transform_1, window_bounds = array<i64: 32, 8>}, {transform_indices = @transform_2, window_bounds = array<i64: 32, 1>}]} {
    %c0 = arith.constant 0 : index
    %c0_0 = arith.constant 0 : index
    %0 = vector.load %arg1[%c0, %c0_0] : memref<32x8xf32, #tpu.memory_space<vmem>>, vector<32x8xf32>
    %c0_1 = arith.constant 0 : index
    %c0_2 = arith.constant 0 : index
    %1 = vector.load %arg2[%c0_1, %c0_2] : memref<32x8xf32, #tpu.memory_space<vmem>>, vector<32x8xf32>
    %cst = arith.constant dense<0.000000e+00> : vector<32xf32>
    %2 = vector.multi_reduction <add>, %0, %cst [1] : vector<32x8xf32> to vector<32xf32>
    %3 = vector.shape_cast %2 : vector<32xf32> to vector<32x1xf32>
    %cst_3 = arith.constant dense<0.000000e+00> : vector<32xf32>
    %4 = vector.multi_reduction <add>, %1, %cst_3 [1] : vector<32x8xf32> to vector<32xf32>
    %5 = vector.shape_cast %4 : vector<32xf32> to vector<32x1xf32>
    %6 = arith.mulf %0, %1 : vector<32x8xf32>
    %cst_4 = arith.constant dense<0.000000e+00> : vector<32xf32>
    %7 = vector.multi_reduction <add>, %6, %cst_4 [1] : vector<32x8xf32> to vector<32xf32>
    %8 = vector.shape_cast %7 : vector<32xf32> to vector<32x1xf32>
    %9 = arith.mulf %0, %0 : vector<32x8xf32>
    %cst_5 = arith.constant dense<0.000000e+00> : vector<32xf32>
    %10 = vector.multi_reduction <add>, %9, %cst_5 [1] : vector<32x8xf32> to vector<32xf32>
    %11 = vector.shape_cast %10 : vector<32xf32> to vector<32x1xf32>
    %12 = arith.mulf %1, %1 : vector<32x8xf32>
    %cst_6 = arith.constant dense<0.000000e+00> : vector<32xf32>
    %13 = vector.multi_reduction <add>, %12, %cst_6 [1] : vector<32x8xf32> to vector<32xf32>
    %14 = vector.shape_cast %13 : vector<32xf32> to vector<32x1xf32>
    %cst_7 = arith.constant 8.000000e+00 : f32
    %15 = vector.broadcast %cst_7 : f32 to vector<32x1xf32>
    %16 = arith.mulf %15, %11 : vector<32x1xf32>
    %17 = arith.mulf %3, %3 : vector<32x1xf32>
    %18 = arith.subf %16, %17 : vector<32x1xf32>
    %cst_8 = arith.constant 8.000000e+00 : f32
    %19 = vector.broadcast %cst_8 : f32 to vector<32x1xf32>
    %20 = arith.mulf %19, %14 : vector<32x1xf32>
    %21 = arith.mulf %5, %5 : vector<32x1xf32>
    %22 = arith.subf %20, %21 : vector<32x1xf32>
    %23 = arith.mulf %18, %22 : vector<32x1xf32>
    %cst_9 = arith.constant 9.99999997E-7 : f32
    %24 = vector.broadcast %cst_9 : f32 to vector<32x1xf32>
    %25 = arith.maximumf %23, %24 : vector<32x1xf32>
    %cst_10 = arith.constant 8.000000e+00 : f32
    %26 = vector.broadcast %cst_10 : f32 to vector<32x1xf32>
    %27 = arith.mulf %26, %8 : vector<32x1xf32>
    %28 = arith.mulf %3, %5 : vector<32x1xf32>
    %29 = arith.subf %27, %28 : vector<32x1xf32>
    %30 = math.sqrt %25 : vector<32x1xf32>
    %cst_11 = arith.constant 9.99999997E-7 : f32
    %31 = vector.broadcast %cst_11 : f32 to vector<32x1xf32>
    %32 = arith.addf %30, %31 : vector<32x1xf32>
    %33 = arith.divf %29, %32 : vector<32x1xf32>
    %cst_12 = arith.constant 1.000000e+00 : f32
    %34 = vector.broadcast %cst_12 : f32 to vector<32x1xf32>
    %35 = arith.subf %34, %33 : vector<32x1xf32>
    %c0_13 = arith.constant 0 : index
    %c0_14 = arith.constant 0 : index
    %36 = vector.load %arg3[%c0_13, %c0_14] : memref<32x1xf32, #tpu.memory_space<vmem>>, vector<32x1xf32>
    tpu.vector_store %arg3[%c0_13, %c0_14], %35 {strides = array<i32>} : memref<32x1xf32, #tpu.memory_space<vmem>>, vector<32x1xf32>,
    return
  }
  func.func @transform_0(%arg0: i32) -> (i32, i32) {
    %c0_i32 = arith.constant 0 : i32
    %c0_i32_0 = arith.constant 0 : i32
    return %arg0, %c0_i32 : i32, i32
  }
  func.func @transform_1(%arg0: i32) -> (i32, i32) {
    %c0_i32 = arith.constant 0 : i32
    %c0_i32_0 = arith.constant 0 : i32
    return %arg0, %c0_i32 : i32, i32
  }
  func.func @transform_2(%arg0: i32) -> (i32, i32) {
    %c0_i32 = arith.constant 0 : i32
    %c0_i32_0 = arith.constant 0 : i32
    return %arg0, %c0_i32 : i32, i32
  }
}

</mosaic_0001>

<llo_original>
// kernel: neg_pearson.1
$region0: #{neg_pearson.1}
  #allocation0 [shape = 'u32[]', space=smem, size = 0x4, offset = 0x4, fixed_abs, tag = 'smem constant byte address 0x4 - core index']
  #allocation1 [shape = 'u32[72,128]{1,0:T(1,128)}', space=vmem, size = 0x9000, scoped, tag = 'internal scratch']
  %s0 = inlined_call_operand.vmem [shape: f32[32,8], index: 0, kind: input, shape index: {}]
  %s1 = inlined_call_operand.vmem [shape: f32[32,8], index: 1, kind: input, shape index: {}]
  %s2 = inlined_call_operand.vmem [shape: f32[32,1], index: 2, kind: output, shape index: {}]
  %s3 = sld [smem:[#allocation0]]
  $region18: #{neg_pearson.1} parent=0
    _
  %s5 = ssub.s32 1, %s3
  %s6 = scalar_select 0, %s5, %s3
  // Predicated region
  $region2: #{neg_pearson.1} parent=0 // pred_check
    _
  $region3: #{neg_pearson.1} parent=0 // pred_check_branch
    %8 = sbr.rel (0) target = $region5
  $region4: #{neg_pearson.1} parent=0 // pred_region
    _
  $region5: #{neg_pearson.1} parent=0 // pred_fallthru
    _
  // Predicated region
  $region6: #{neg_pearson.1} parent=0 // pred_check
    _
  $region7: #{neg_pearson.1} parent=0 // pred_check_branch
    %10 = sbr.rel (0) target = $region9
  $region8: #{neg_pearson.1} parent=0 // pred_region
    _
  $region9: #{neg_pearson.1} parent=0 // pred_fallthru
    _
  %v11 = vld [vmem:[%s0] sm:$0xff]
  %v12 = vld [vmem:[%s0 + $0x8] sm:$0xff]
  %v13 = vld [vmem:[%s0 + $0x10] sm:$0xff]
  %v14 = vld [vmem:[%s0 + $0x18] sm:$0xff]
  %v15 = vld [vmem:[%s1] sm:$0xff]
  %v16 = vld [vmem:[%s1 + $0x8] sm:$0xff]
  %v17 = vld [vmem:[%s1 + $0x10] sm:$0xff]
  %v18 = vld [vmem:[%s1 + $0x18] sm:$0xff]
  %vm19 = vcmask 64512
  %v20 = vsel %vm19, %v11, 0.0
  %21 = vadd.xlane.f32.xlu0 %v20
  %v22 = vpop.xlane.xlu0 %21
  %v23 = vsel %vm19, %v12, 0.0
  %24 = vadd.xlane.f32.xlu0 %v23
  %v25 = vpop.xlane.xlu0 %24
  %v26 = vsel %vm19, %v13, 0.0
  %27 = vadd.xlane.f32.xlu0 %v26
  %v28 = vpop.xlane.xlu0 %27
  %v29 = vsel %vm19, %v14, 0.0
  %30 = vadd.xlane.f32.xlu0 %v29
  %v31 = vpop.xlane.xlu0 %30
  %v32 = vsel %vm19, %v15, 0.0
  %33 = vadd.xlane.f32.xlu0 %v32
  %v34 = vpop.xlane.xlu0 %33
  %v35 = vsel %vm19, %v16, 0.0
  %36 = vadd.xlane.f32.xlu0 %v35
  %v37 = vpop.xlane.xlu0 %36
  %v38 = vsel %vm19, %v17, 0.0
  %39 = vadd.xlane.f32.xlu0 %v38
  %v40 = vpop.xlane.xlu0 %39
  %v41 = vsel %vm19, %v18, 0.0
  %42 = vadd.xlane.f32.xlu0 %v41
  %v43 = vpop.xlane.xlu0 %42
  %v44 = vmul.f32 %v11, %v15
  %v45 = vmul.f32 %v12, %v16
  %v46 = vmul.f32 %v13, %v17
  %v47 = vmul.f32 %v14, %v18
  %v48 = vsel %vm19, %v44, 0.0
  %49 = vadd.xlane.f32.xlu0 %v48
  %v50 = vpop.xlane.xlu0 %49
  %v51 = vsel %vm19, %v45, 0.0
  %52 = vadd.xlane.f32.xlu0 %v51
  %v53 = vpop.xlane.xlu0 %52
  %v54 = vsel %vm19, %v46, 0.0
  %55 = vadd.xlane.f32.xlu0 %v54
  %v56 = vpop.xlane.xlu0 %55
  %v57 = vsel %vm19, %v47, 0.0
  %58 = vadd.xlane.f32.xlu0 %v57
  %v59 = vpop.xlane.xlu0 %58
  %v60 = vmul.f32 %v11, %v11
  %v61 = vmul.f32 %v12, %v12
  %v62 = vmul.f32 %v13, %v13
  %v63 = vmul.f32 %v14, %v14
  %v64 = vsel %vm19, %v60, 0.0
  %65 = vadd.xlane.f32.xlu0 %v64
  %v66 = vpop.xlane.xlu0 %65
  %v67 = vsel %vm19, %v61, 0.0
  %68 = vadd.xlane.f32.xlu0 %v67
  %v69 = vpop.xlane.xlu0 %68
  %v70 = vsel %vm19, %v62, 0.0
  %71 = vadd.xlane.f32.xlu0 %v70
  %v72 = vpop.xlane.xlu0 %71
  %v73 = vsel %vm19, %v63, 0.0
  %74 = vadd.xlane.f32.xlu0 %v73
  %v75 = vpop.xlane.xlu0 %74
  %v76 = vmul.f32 %v15, %v15
  %v77 = vmul.f32 %v16, %v16
  %v78 = vmul.f32 %v17, %v17
  %v79 = vmul.f32 %v18, %v18
  %v80 = vsel %vm19, %v76, 0.0
  %81 = vadd.xlane.f32.xlu0 %v80
  %v82 = vpop.xlane.xlu0 %81
  %v83 = vsel %vm19, %v77, 0.0
  %84 = vadd.xlane.f32.xlu0 %v83
  %v85 = vpop.xlane.xlu0 %84
  %v86 = vsel %vm19, %v78, 0.0
  %87 = vadd.xlane.f32.xlu0 %v86
  %v88 = vpop.xlane.xlu0 %87
  %v89 = vsel %vm19, %v79, 0.0
  %90 = vadd.xlane.f32.xlu0 %v89
  %v91 = vpop.xlane.xlu0 %90
  %v92 = vmul.f32 %v66, 8.0
  %v93 = vmul.f32 %v69, 8.0
  %v94 = vmul.f32 %v72, 8.0
  %v95 = vmul.f32 %v75, 8.0
  %v96 = vmul.f32 %v22, %v22
  %v97 = vmul.f32 %v25, %v25
  %v98 = vmul.f32 %v28, %v28
  %v99 = vmul.f32 %v31, %v31
  %v100 = vsub.f32 %v92, %v96
  %v101 = vsub.f32 %v93, %v97
  %v102 = vsub.f32 %v94, %v98
  %v103 = vsub.f32 %v95, %v99
  %v104 = vmul.f32 %v82, 8.0
  %v105 = vmul.f32 %v85, 8.0
  %v106 = vmul.f32 %v88, 8.0
  %v107 = vmul.f32 %v91, 8.0
  %v108 = vmul.f32 %v34, %v34
  %v109 = vmul.f32 %v37, %v37
  %v110 = vmul.f32 %v40, %v40
  %v111 = vmul.f32 %v43, %v43
  %v112 = vsub.f32 %v104, %v108
  %v113 = vsub.f32 %v105, %v109
  %v114 = vsub.f32 %v106, %v110
  %v115 = vsub.f32 %v107, %v111
  %v116 = vmul.f32 %v100, %v112
  %v117 = vmul.f32 %v101, %v113
  %v118 = vmul.f32 %v102, %v114
  %v119 = vmul.f32 %v103, %v115
  %v120 = vmax.f32 %v116, 1e-06
  %v121 = vmax.f32 %v117, 1e-06
  %v122 = vmax.f32 %v118, 1e-06
  %v123 = vmax.f32 %v119, 1e-06
  %v124 = vmul.f32 %v50, 8.0
  %v125 = vmul.f32 %v53, 8.0
  %v126 = vmul.f32 %v56, 8.0
  %v127 = vmul.f32 %v59, 8.0
  %v128 = vmul.f32 %v22, %v34
  %v129 = vmul.f32 %v25, %v37
  %v130 = vmul.f32 %v28, %v40
  %v131 = vmul.f32 %v31, %v43
  %v132 = vsub.f32 %v124, %v128
  %v133 = vsub.f32 %v125, %v129
  %v134 = vsub.f32 %v126, %v130
  %v135 = vsub.f32 %v127, %v131
  %v136 = vrsqrt.pop %v120
  %v137 = vmul.f32 %v136, %v120
  %v138 = vmul.f32 %v137, %v136
  %v139 = vmul.f32 0.5, %v138
  %v140 = vsub.f32 1.5, %v139
  %v141 = vmul.f32 %v136, %v140
  %v142 = vmul.f32 %v120, %v141
  %vm143 = vcmp.eq.f32.partialorder %v120, inf
  %v144 = vsel %vm143, %v120, %v142
  %vm145 = vcmp.eq.f32.partialorder %v120, 0.0
  %v146 = vand.u32 %v120, 2147483648
  %v147 = vsel %vm145, %v146, %v144
  %v148 = vrsqrt.pop %v121
  %v149 = vmul.f32 %v148, %v121
  %v150 = vmul.f32 %v149, %v148
  %v151 = vmul.f32 0.5, %v150
  %v152 = vsub.f32 1.5, %v151
  %v153 = vmul.f32 %v148, %v152
  %v154 = vmul.f32 %v121, %v153
  %vm155 = vcmp.eq.f32.partialorder %v121, inf
  %v156 = vsel %vm155, %v121, %v154
  %vm157 = vcmp.eq.f32.partialorder %v121, 0.0
  %v158 = vand.u32 %v121, 2147483648
  %v159 = vsel %vm157, %v158, %v156
  %v160 = vrsqrt.pop %v122
  %v161 = vmul.f32 %v160, %v122
  %v162 = vmul.f32 %v161, %v160
  %v163 = vmul.f32 0.5, %v162
  %v164 = vsub.f32 1.5, %v163
  %v165 = vmul.f32 %v160, %v164
  %v166 = vmul.f32 %v122, %v165
  %vm167 = vcmp.eq.f32.partialorder %v122, inf
  %v168 = vsel %vm167, %v122, %v166
  %vm169 = vcmp.eq.f32.partialorder %v122, 0.0
  %v170 = vand.u32 %v122, 2147483648
  %v171 = vsel %vm169, %v170, %v168
  %v172 = vrsqrt.pop %v123
  %v173 = vmul.f32 %v172, %v123
  %v174 = vmul.f32 %v173, %v172
  %v175 = vmul.f32 0.5, %v174
  %v176 = vsub.f32 1.5, %v175
  %v177 = vmul.f32 %v172, %v176
  %v178 = vmul.f32 %v123, %v177
  %vm179 = vcmp.eq.f32.partialorder %v123, inf
  %v180 = vsel %vm179, %v123, %v178
  %vm181 = vcmp.eq.f32.partialorder %v123, 0.0
  %v182 = vand.u32 %v123, 2147483648
  %v183 = vsel %vm181, %v182, %v180
  %v184 = vadd.f32 %v147, 1e-06
  %v185 = vadd.f32 %v159, 1e-06
  %v186 = vadd.f32 %v171, 1e-06
  %v187 = vadd.f32 %v183, 1e-06
  %v188 = vrcp.pop %v184
  %v189 = vmul.f32 %v184, %v188
  %v190 = vsub.f32 1.0, %v189
  %v191 = vmul.f32 %v188, %v190
  %v192 = vadd.f32 %v188, %v191
  %vm193 = vweird.f32 %v184
  %vm194 = vweird.f32 %v188
  %vm195 = vmor %vm193, %vm194
  %v196 = vsel %vm195, %v188, %v192
  %v197 = vand.u32 2147483647, %v184
  %vm198 = vcmp.eq.f32.partialorder %v197, 8.507059e+37
  %v199 = vand.u32 %v184, 2147483648
  %v200 = vor.u32 1.1754944e-38, %v199
  %v201 = vsel %vm198, %v200, %v196
  %v202 = vmul.f32 %v132, %v201
  %v203 = vrcp.pop %v185
  %v204 = vmul.f32 %v185, %v203
  %v205 = vsub.f32 1.0, %v204
  %v206 = vmul.f32 %v203, %v205
  %v207 = vadd.f32 %v203, %v206
  %vm208 = vweird.f32 %v185
  %vm209 = vweird.f32 %v203
  %vm210 = vmor %vm208, %vm209
  %v211 = vsel %vm210, %v203, %v207
  %v212 = vand.u32 2147483647, %v185
  %vm213 = vcmp.eq.f32.partialorder %v212, 8.507059e+37
  %v214 = vand.u32 %v185, 2147483648
  %v215 = vor.u32 1.1754944e-38, %v214
  %v216 = vsel %vm213, %v215, %v211
  %v217 = vmul.f32 %v133, %v216
  %v218 = vrcp.pop %v186
  %v219 = vmul.f32 %v186, %v218
  %v220 = vsub.f32 1.0, %v219
  %v221 = vmul.f32 %v218, %v220
  %v222 = vadd.f32 %v218, %v221
  %vm223 = vweird.f32 %v186
  %vm224 = vweird.f32 %v218
  %vm225 = vmor %vm223, %vm224
  %v226 = vsel %vm225, %v218, %v222
  %v227 = vand.u32 2147483647, %v186
  %vm228 = vcmp.eq.f32.partialorder %v227, 8.507059e+37
  %v229 = vand.u32 %v186, 2147483648
  %v230 = vor.u32 1.1754944e-38, %v229
  %v231 = vsel %vm228, %v230, %v226
  %v232 = vmul.f32 %v134, %v231
  %v233 = vrcp.pop %v187
  %v234 = vmul.f32 %v187, %v233
  %v235 = vsub.f32 1.0, %v234
  %v236 = vmul.f32 %v233, %v235
  %v237 = vadd.f32 %v233, %v236
  %vm238 = vweird.f32 %v187
  %vm239 = vweird.f32 %v233
  %vm240 = vmor %vm238, %vm239
  %v241 = vsel %vm240, %v233, %v237
  %v242 = vand.u32 2147483647, %v187
  %vm243 = vcmp.eq.f32.partialorder %v242, 8.507059e+37
  %v244 = vand.u32 %v187, 2147483648
  %v245 = vor.u32 1.1754944e-38, %v244
  %v246 = vsel %vm243, %v245, %v241
  %v247 = vmul.f32 %v135, %v246
  %v248 = vsub.f32 1.0, %v202
  %v249 = vsub.f32 1.0, %v217
  %v250 = vsub.f32 1.0, %v232
  %v251 = vsub.f32 1.0, %v247
  %vm252 = vcmask 7168
  %253 = vst.msk [vmem:[%s2] sm:$0xff] %vm252, %v248
  %254 = vst.msk [vmem:[%s2 + $0x8] sm:$0xff] %vm252, %v249
  %255 = vst.msk [vmem:[%s2 + $0x10] sm:$0xff] %vm252, %v250
  %256 = vst.msk [vmem:[%s2 + $0x18] sm:$0xff] %vm252, %v251
  // Predicated region
  $region10: #{neg_pearson.1} parent=0 // pred_check
    _
  $region11: #{neg_pearson.1} parent=0 // pred_check_branch
    %258 = sbr.rel (0) target = $region13
  $region12: #{neg_pearson.1} parent=0 // pred_region
    _
  $region13: #{neg_pearson.1} parent=0 // pred_fallthru
    _
  // Predicated region
  $region14: #{neg_pearson.1} parent=0 // pred_check
    _
  $region15: #{neg_pearson.1} parent=0 // pred_check_branch
    %260 = sbr.rel (0) target = $region17
  $region16: #{neg_pearson.1} parent=0 // pred_region
    _
  $region17: #{neg_pearson.1} parent=0 // pred_fallthru
    _

</llo_original>
